<compile_context>
chip_gen: v5e
topology: v5e:2x2
jax: 0.10.0
libtpu: 0.0.40
codegen_flags: <defaults>
</compile_context>

<pallas_src>
import math

import jax
import jax.numpy as jnp
from jax.experimental import pallas as pl
from jax.experimental.pallas import tpu as pltpu


# ----------------------------- configuration -------------------------------
COORD_DIM = 16          # manifold.coord_dim
HIDDEN_DIM = 32         # hidden_dim
NUM_HIDDEN_LAYERS = 2   # num_hidden_layers  (>= 1)
DATA_SIZE = (4, 4)      # data_size; prod(data_size) = 16
BATCH = 8               # small batch for the example
OUT_DIM = int(math.prod(DATA_SIZE))

LANES = 128
assert LANES % COORD_DIM == 0, "slab packing requires coord_dim | 128"
PACK = LANES // COORD_DIM          # samples interleaved per slab row (= 8)

_MAX_TB = 8192          # samples per grid step (~1 MiB HBM / step at f32)
_TB_ALIGN = 64          # tb % 64 == 0  ->  slab block sublanes (tb//8) % 8 == 0


def _round_up(x, m):
    return ((x + m - 1) // m) * m


# ------------------------------- kernel ------------------------------------
def _declinear_kernel(x_ref, *refs):
    """Fused MLP on one packed batch slab.

    x_ref:   (tb//PACK, PACK*COORD_DIM)  f32 — PACK samples per 128-lane row.
    refs:    a0, b0, a1, b1, ..., a_last, b_last, out_ref
             a_l : (PACK*in_l, PACK*out_l) block-diagonal kron(I_PACK, W_l.T)
             b_l : (1, PACK*out_l)         bias tiled PACK times
    out_ref: (tb//PACK, PACK*OUT_DIM)    f32 — same packed layout as the input.

    Because every weight is block-diagonal over the PACK interleave, the
    per-sample MLP is computed without ever de-interleaving the slab, and all
    operands / results stay lane-dense (128 or 256 lanes wide).
    """
    out_ref = refs[-1]
    param_refs = refs[:-1]
    n_layers = len(param_refs) // 2       # hidden layers + final fc31

    h = x_ref[...]                        # (tb//PACK, 128) f32
    for layer in range(n_layers):
        a = param_refs[2 * layer][...]    # (PACK*in, PACK*out)
        b = param_refs[2 * layer + 1][...]  # (1, PACK*out)
        h = jnp.dot(h, a, preferred_element_type=jnp.float32) + b
        if layer < n_layers - 1:          # non_lin == ReLU on hidden layers only
            h = jnp.maximum(h, 0.0)

    out_ref[...] = h.astype(out_ref.dtype)   # lane-dense store


# --------------------------- parameter packing ------------------------------
def _blockify_params(params):
    """(W (out,in), b (out,1)) pairs -> slab-layout kernel params.

    W -> kron(I_PACK, W.T): a (PACK*in, PACK*out) block-diagonal matrix, so a
    slab row holding PACK interleaved samples is mapped sample-wise by a single
    matmul.  b -> (1, PACK*out) row, tiled PACK times.
    Cheap (~1 MiB of work); in a real model hoist this out of the per-call jit.
    """
    eye = jnp.eye(PACK, dtype=jnp.float32)
    out = []
    for i in range(0, len(params), 2):
        w, b = params[i], params[i + 1]
        a = jnp.kron(eye, w.T.astype(jnp.float32))
        brow = jnp.tile(b.reshape(1, -1).astype(jnp.float32), (1, PACK))
        out.extend([a, brow])
    return tuple(out)


# ------------------------------- wrapper ------------------------------------
@jax.jit
def declinear_forward(z, params):
    """Pallas implementation of DecLinear.forward.

    Args:
      z: (..., COORD_DIM) float32 latent codes.
      params: flat tuple (w0, b0, ..., w_out, b_out); weights (out, in),
              biases (out, 1) — PyTorch nn.Linear layout.

    Returns:
      (mu, ones_like(mu)) with mu of shape (*z.shape[:-1], *DATA_SIZE).
    """
    assert z.shape[-1] == COORD_DIM
    lead_shape = z.shape[:-1]
    z2d = z.reshape(-1, COORD_DIM).astype(jnp.float32)
    bsz = z2d.shape[0]

    # Batch tile: as large as possible (amortize the ~0.35 us per-step cost),
    # but aim for >= 2 grid steps so v7x can use both TensorCores.
    tb = _round_up(-(-bsz // 2), _TB_ALIGN)          # ~half the batch, aligned
    tb = max(_TB_ALIGN, min(_MAX_TB, tb))
    padded = _round_up(bsz, tb)
    if padded != bsz:
        z2d = jnp.pad(z2d, ((0, padded - bsz), (0, 0)))

    # Free, lane-dense view of the native (padded, 16) row-major array:
    # PACK samples interleaved per 128-lane row.  No transpose anywhere.
    x_slab = z2d.reshape(padded // PACK, PACK * COORD_DIM)

    kparams = _blockify_params(params)

    grid = (padded // tb,)
    rows = tb // PACK                                  # slab rows per step

    in_specs = [pl.BlockSpec((rows, PACK * COORD_DIM), lambda i: (i, 0))]
    # Weights/biases: whole array, constant index_map -> fetched once, resident.
    in_specs += [pl.BlockSpec(p.shape, lambda i: (0, 0)) for p in kparams]
    out_specs = pl.BlockSpec((rows, PACK * OUT_DIM), lambda i: (i, 0))

    # Advisory cost for XLA's scheduler (actual executed matmul flops + bytes).
    per_sample_macs = (COORD_DIM * HIDDEN_DIM
                       + (NUM_HIDDEN_LAYERS - 1) * HIDDEN_DIM * HIDDEN_DIM
                       + HIDDEN_DIM * OUT_DIM)
    flops = int(2 * padded * PACK * per_sample_macs)
    bytes_accessed = int(4 * (padded * (COORD_DIM + OUT_DIM)
                              + sum(math.prod(p.shape) for p in kparams)))

    mu_slab = pl.pallas_call(
        _declinear_kernel,
        out_shape=jax.ShapeDtypeStruct((padded // PACK, PACK * OUT_DIM),
                                       jnp.float32),
        grid=grid,
        in_specs=in_specs,
        out_specs=out_specs,
        compiler_params=pltpu.CompilerParams(
            dimension_semantics=("parallel",)),
        cost_estimate=pl.CostEstimate(
            flops=flops, transcendentals=0, bytes_accessed=bytes_accessed),
    )(x_slab, *kparams)

    # Free reshape back to native (padded, 16), drop padding, shape to data_size.
    mu = mu_slab.reshape(padded, OUT_DIM)[:bsz].reshape(*lead_shape, *DATA_SIZE)
    return mu, jnp.ones_like(mu)


# --------------------------- parameter init ---------------------------------
def init_params(key):
    """Deterministic init; weights (out, in), biases (out, 1) — PyTorch-like."""
    dims = [COORD_DIM] + [HIDDEN_DIM] * NUM_HIDDEN_LAYERS + [OUT_DIM]
    params = []
    for i in range(len(dims) - 1):
        fan_in, fan_out = dims[i], dims[i + 1]
        key, kw, kb = jax.random.split(key, 3)
        scale = 1.0 / jnp.sqrt(jnp.float32(fan_in))
        w = jax.random.uniform(kw, (fan_out, fan_in), jnp.float32, -scale, scale)
        b = jax.random.uniform(kb, (fan_out, 1), jnp.float32, -scale, scale)
        params.extend([w, b])
    return tuple(params)


# ------------------------------ reference -----------------------------------
def declinear_reference(z, params):
    h = z.reshape(-1, z.shape[-1])
    for layer in range(NUM_HIDDEN_LAYERS):
        w, b = params[2 * layer], params[2 * layer + 1]
        h = jnp.maximum(h @ w.T + b.T, 0.0)
    w_out, b_out = params[-2], params[-1]
    mu = (h @ w_out.T + b_out.T).reshape(*z.shape[:-1], *DATA_SIZE)
    return mu, jnp.ones_like(mu)


# -------------------------------- main ---------------------------------------
if __name__ == "__main__":
    key = jax.random.PRNGKey(0)
    key, kz, kp = jax.random.split(key, 3)

    z = jax.random.normal(kz, (BATCH, COORD_DIM), jnp.float32)
    params = init_params(kp)

    mu, logvar_like = declinear_forward(z, params)
    mu = jax.block_until_ready(mu)
    logvar_like = jax.block_until_ready(logvar_like)

    # Correctness check against a pure-JAX reference (f32 path; 1e-4 tolerance
    # only to absorb accumulation-order differences of the MXU matmuls).
    mu_ref, ones_ref = declinear_reference(z, params)
    assert mu.shape == (BATCH, *DATA_SIZE), mu.shape
    assert logvar_like.shape == mu.shape
    assert jnp.allclose(mu, mu_ref, atol=1e-4, rtol=1e-4), "mu mismatch"
    assert jnp.all(logvar_like == 1.0), "second output must be ones_like(mu)"

    print("KERNEL_OK")
</pallas_src>

<mosaic_0001>
module attributes {stable_mosaic.version = 11 : i64} {
  func.func @_declinear_kernel(%arg0: i32, %arg1: memref<8x128xf32, #tpu.memory_space<vmem>>, %arg2: memref<128x256xf32, #tpu.memory_space<vmem>>, %arg3: memref<1x256xf32, #tpu.memory_space<vmem>>, %arg4: memref<256x256xf32, #tpu.memory_space<vmem>>, %arg5: memref<1x256xf32, #tpu.memory_space<vmem>>, %arg6: memref<256x128xf32, #tpu.memory_space<vmem>>, %arg7: memref<1x128xf32, #tpu.memory_space<vmem>>, %arg8: memref<8x128xf32, #tpu.memory_space<vmem>>) attributes {dimension_semantics = [#tpu.dimension_semantics<parallel>], iteration_bounds = array<i64: 1>, scalar_prefetch = 0 : i64, scratch_operands = 0 : i64, tpu.core_type = #tpu.core_type<tc>, window_params = [{transform_indices = @transform_0, window_bounds = array<i64: 8, 128>}, {pipeline_mode = #tpu.pipeline_mode<synchronous>, transform_indices = @transform_1, window_bounds = array<i64: 128, 256>}, {pipeline_mode = #tpu.pipeline_mode<synchronous>, transform_indices = @transform_2, window_bounds = array<i64: 1, 256>}, {pipeline_mode = #tpu.pipeline_mode<synchronous>, transform_indices = @transform_3, window_bounds = array<i64: 256, 256>}, {pipeline_mode = #tpu.pipeline_mode<synchronous>, transform_indices = @transform_4, window_bounds = array<i64: 1, 256>}, {pipeline_mode = #tpu.pipeline_mode<synchronous>, transform_indices = @transform_5, window_bounds = array<i64: 256, 128>}, {pipeline_mode = #tpu.pipeline_mode<synchronous>, transform_indices = @transform_6, window_bounds = array<i64: 1, 128>}, {transform_indices = @transform_7, window_bounds = array<i64: 8, 128>}]} {
    %c0 = arith.constant 0 : index
    %c0_0 = arith.constant 0 : index
    %0 = vector.load %arg1[%c0, %c0_0] : memref<8x128xf32, #tpu.memory_space<vmem>>, vector<8x128xf32>
    %c0_1 = arith.constant 0 : index
    %c0_2 = arith.constant 0 : index
    %1 = vector.load %arg2[%c0_1, %c0_2] : memref<128x256xf32, #tpu.memory_space<vmem>>, vector<128x256xf32>
    %c0_3 = arith.constant 0 : index
    %c0_4 = arith.constant 0 : index
    %2 = vector.load %arg3[%c0_3, %c0_4] : memref<1x256xf32, #tpu.memory_space<vmem>>, vector<1x256xf32>
    %cst = arith.constant dense<0.000000e+00> : vector<8x256xf32>
    %3 = tpu.matmul %0, %1, %cst {dimension_numbers = #tpu.dot_dimension_numbers<[1], [0], [0], [1], [0, 0, 1, 1], [], []>} : vector<8x128xf32>, vector<128x256xf32>, vector<8x256xf32> -> vector<8x256xf32>
    %4 = vector.broadcast %2 : vector<1x256xf32> to vector<8x256xf32>
    %5 = arith.addf %3, %4 : vector<8x256xf32>
    %cst_5 = arith.constant 0.000000e+00 : f32
    %6 = vector.broadcast %cst_5 : f32 to vector<8x256xf32>
    %7 = arith.maximumf %5, %6 : vector<8x256xf32>
    %c0_6 = arith.constant 0 : index
    %c0_7 = arith.constant 0 : index
    %8 = vector.load %arg4[%c0_6, %c0_7] : memref<256x256xf32, #tpu.memory_space<vmem>>, vector<256x256xf32>
    %c0_8 = arith.constant 0 : index
    %c0_9 = arith.constant 0 : index
    %9 = vector.load %arg5[%c0_8, %c0_9] : memref<1x256xf32, #tpu.memory_space<vmem>>, vector<1x256xf32>
    %cst_10 = arith.constant dense<0.000000e+00> : vector<8x256xf32>
    %10 = tpu.matmul %7, %8, %cst_10 {dimension_numbers = #tpu.dot_dimension_numbers<[1], [0], [0], [1], [0, 0, 1, 1], [], []>} : vector<8x256xf32>, vector<256x256xf32>, vector<8x256xf32> -> vector<8x256xf32>
    %11 = vector.broadcast %9 : vector<1x256xf32> to vector<8x256xf32>
    %12 = arith.addf %10, %11 : vector<8x256xf32>
    %cst_11 = arith.constant 0.000000e+00 : f32
    %13 = vector.broadcast %cst_11 : f32 to vector<8x256xf32>
    %14 = arith.maximumf %12, %13 : vector<8x256xf32>
    %c0_12 = arith.constant 0 : index
    %c0_13 = arith.constant 0 : index
    %15 = vector.load %arg6[%c0_12, %c0_13] : memref<256x128xf32, #tpu.memory_space<vmem>>, vector<256x128xf32>
    %c0_14 = arith.constant 0 : index
    %c0_15 = arith.constant 0 : index
    %16 = vector.load %arg7[%c0_14, %c0_15] : memref<1x128xf32, #tpu.memory_space<vmem>>, vector<1x128xf32>
    %cst_16 = arith.constant dense<0.000000e+00> : vector<8x128xf32>
    %17 = tpu.matmul %14, %15, %cst_16 {dimension_numbers = #tpu.dot_dimension_numbers<[1], [0], [0], [1], [0, 0, 1, 1], [], []>} : vector<8x256xf32>, vector<256x128xf32>, vector<8x128xf32> -> vector<8x128xf32>
    %18 = vector.broadcast %16 : vector<1x128xf32> to vector<8x128xf32>
    %19 = arith.addf %17, %18 : vector<8x128xf32>
    %c0_17 = arith.constant 0 : index
    %c0_18 = arith.constant 0 : index
    %20 = vector.load %arg8[%c0_17, %c0_18] : memref<8x128xf32, #tpu.memory_space<vmem>>, vector<8x128xf32>
    tpu.vector_store %arg8[%c0_17, %c0_18], %19 {strides = array<i32>} : memref<8x128xf32, #tpu.memory_space<vmem>>, vector<8x128xf32>,
    return
  }
  func.func @transform_0(%arg0: i32) -> (i32, i32) {
    %c0_i32 = arith.constant 0 : i32
    %c0_i32_0 = arith.constant 0 : i32
    return %arg0, %c0_i32 : i32, i32
  }
  func.func @transform_1(%arg0: i32) -> (i32, i32) {
    %c0_i32 = arith.constant 0 : i32
    %c0_i32_0 = arith.constant 0 : i32
    %c0_i32_1 = arith.constant 0 : i32
    return %c0_i32, %c0_i32_0 : i32, i32
  }
  func.func @transform_2(%arg0: i32) -> (i32, i32) {
    %c0_i32 = arith.constant 0 : i32
    %c0_i32_0 = arith.constant 0 : i32
    %c0_i32_1 = arith.constant 0 : i32
    return %c0_i32, %c0_i32_0 : i32, i32
  }
  func.func @transform_3(%arg0: i32) -> (i32, i32) {
    %c0_i32 = arith.constant 0 : i32
    %c0_i32_0 = arith.constant 0 : i32
    %c0_i32_1 = arith.constant 0 : i32
    return %c0_i32, %c0_i32_0 : i32, i32
  }
  func.func @transform_4(%arg0: i32) -> (i32, i32) {
    %c0_i32 = arith.constant 0 : i32
    %c0_i32_0 = arith.constant 0 : i32
    %c0_i32_1 = arith.constant 0 : i32
    return %c0_i32, %c0_i32_0 : i32, i32
  }
  func.func @transform_5(%arg0: i32) -> (i32, i32) {
    %c0_i32 = arith.constant 0 : i32
    %c0_i32_0 = arith.constant 0 : i32
    %c0_i32_1 = arith.constant 0 : i32
    return %c0_i32, %c0_i32_0 : i32, i32
  }
  func.func @transform_6(%arg0: i32) -> (i32, i32) {
    %c0_i32 = arith.constant 0 : i32
    %c0_i32_0 = arith.constant 0 : i32
    %c0_i32_1 = arith.constant 0 : i32
    return %c0_i32, %c0_i32_0 : i32, i32
  }
  func.func @transform_7(%arg0: i32) -> (i32, i32) {
    %c0_i32 = arith.constant 0 : i32
    %c0_i32_0 = arith.constant 0 : i32
    return %arg0, %c0_i32 : i32, i32
  }
}

</mosaic_0001>

<llo_original>
// kernel: declinear_forward.1
$region0: #{declinear_forward.1}
  #allocation0 [shape = 'u32[]', space=smem, size = 0x4, offset = 0x4, fixed_abs, tag = 'smem constant byte address 0x4 - core index']
  #allocation1 [shape = 'u32[72,128]{1,0:T(1,128)}', space=vmem, size = 0x9000, scoped, tag = 'internal scratch']
  %s0 = inlined_call_operand.vmem [shape: f32[8,128], index: 0, kind: input, shape index: {}]
  %s1 = inlined_call_operand.vmem [shape: f32[128,256], index: 1, kind: input, shape index: {}]
  %s2 = inlined_call_operand.vmem [shape: f32[1,256], index: 2, kind: input, shape index: {}]
  %s3 = inlined_call_operand.vmem [shape: f32[256,256], index: 3, kind: input, shape index: {}]
  %s4 = inlined_call_operand.vmem [shape: f32[1,256], index: 4, kind: input, shape index: {}]
  %s5 = inlined_call_operand.vmem [shape: f32[256,128], index: 5, kind: input, shape index: {}]
  %s6 = inlined_call_operand.vmem [shape: f32[1,128], index: 6, kind: input, shape index: {}]
  %s7 = inlined_call_operand.vmem [shape: f32[8,128], index: 7, kind: output, shape index: {}]
  %s8 = sld [smem:[#allocation0]]
  $region38: #{declinear_forward.1} parent=0
    _
  %s10 = ssub.s32 1, %s8
  %s11 = scalar_select 0, %s10, %s8
  // Predicated region
  $region2: #{declinear_forward.1} parent=0 // pred_check
    _
  $region3: #{declinear_forward.1} parent=0 // pred_check_branch
    %13 = sbr.rel (0) target = $region5
  $region4: #{declinear_forward.1} parent=0 // pred_region
    _
  $region5: #{declinear_forward.1} parent=0 // pred_fallthru
    _
  // Predicated region
  $region6: #{declinear_forward.1} parent=0 // pred_check
    _
  $region7: #{declinear_forward.1} parent=0 // pred_check_branch
    %15 = sbr.rel (0) target = $region9
  $region8: #{declinear_forward.1} parent=0 // pred_region
    _
  $region9: #{declinear_forward.1} parent=0 // pred_fallthru
    _
  // Predicated region
  $region10: #{declinear_forward.1} parent=0 // pred_check
    _
  $region11: #{declinear_forward.1} parent=0 // pred_check_branch
    %17 = sbr.rel (0) target = $region13
  $region12: #{declinear_forward.1} parent=0 // pred_region
    _
  $region13: #{declinear_forward.1} parent=0 // pred_fallthru
    _
  // Predicated region
  $region14: #{declinear_forward.1} parent=0 // pred_check
    _
  $region15: #{declinear_forward.1} parent=0 // pred_check_branch
    %19 = sbr.rel (0) target = $region17
  $region16: #{declinear_forward.1} parent=0 // pred_region
    _
  $region17: #{declinear_forward.1} parent=0 // pred_fallthru
    _
  // Predicated region
  $region18: #{declinear_forward.1} parent=0 // pred_check
    _
  $region19: #{declinear_forward.1} parent=0 // pred_check_branch
    %21 = sbr.rel (0) target = $region21
  $region20: #{declinear_forward.1} parent=0 // pred_region
    _
  $region21: #{declinear_forward.1} parent=0 // pred_fallthru
    _
  // Predicated region
  $region22: #{declinear_forward.1} parent=0 // pred_check
    _
  $region23: #{declinear_forward.1} parent=0 // pred_check_branch
    %23 = sbr.rel (0) target = $region25
  $region24: #{declinear_forward.1} parent=0 // pred_region
    _
  $region25: #{declinear_forward.1} parent=0 // pred_fallthru
    _
  // Predicated region
  $region26: #{declinear_forward.1} parent=0 // pred_check
    _
  $region27: #{declinear_forward.1} parent=0 // pred_check_branch
    %25 = sbr.rel (0) target = $region29
  $region28: #{declinear_forward.1} parent=0 // pred_region
    _
  $region29: #{declinear_forward.1} parent=0 // pred_fallthru
    _
  %v26 = vld [vmem:[%s0] sm:$0xff]
  %v27 = vld [vmem:[%s1] sm:$0xff]
  %v28 = vld [vmem:[%s1 + $0x8] sm:$0xff]
  %v29 = vld [vmem:[%s1 + $0x10] sm:$0xff]
  %v30 = vld [vmem:[%s1 + $0x18] sm:$0xff]
  %v31 = vld [vmem:[%s1 + $0x20] sm:$0xff]
  %v32 = vld [vmem:[%s1 + $0x28] sm:$0xff]
  %v33 = vld [vmem:[%s1 + $0x30] sm:$0xff]
  %v34 = vld [vmem:[%s1 + $0x38] sm:$0xff]
  %v35 = vld [vmem:[%s1 + $0x40] sm:$0xff]
  %v36 = vld [vmem:[%s1 + $0x48] sm:$0xff]
  %v37 = vld [vmem:[%s1 + $0x50] sm:$0xff]
  %v38 = vld [vmem:[%s1 + $0x58] sm:$0xff]
  %v39 = vld [vmem:[%s1 + $0x60] sm:$0xff]
  %v40 = vld [vmem:[%s1 + $0x68] sm:$0xff]
  %v41 = vld [vmem:[%s1 + $0x70] sm:$0xff]
  %v42 = vld [vmem:[%s1 + $0x78] sm:$0xff]
  %v43 = vld [vmem:[%s1 + $0x80] sm:$0xff]
  %v44 = vld [vmem:[%s1 + $0x88] sm:$0xff]
  %v45 = vld [vmem:[%s1 + $0x90] sm:$0xff]
  %v46 = vld [vmem:[%s1 + $0x98] sm:$0xff]
  %v47 = vld [vmem:[%s1 + $0xa0] sm:$0xff]
  %v48 = vld [vmem:[%s1 + $0xa8] sm:$0xff]
  %v49 = vld [vmem:[%s1 + $0xb0] sm:$0xff]
  %v50 = vld [vmem:[%s1 + $0xb8] sm:$0xff]
  %v51 = vld [vmem:[%s1 + $0xc0] sm:$0xff]
  %v52 = vld [vmem:[%s1 + $0xc8] sm:$0xff]
  %v53 = vld [vmem:[%s1 + $0xd0] sm:$0xff]
  %v54 = vld [vmem:[%s1 + $0xd8] sm:$0xff]
  %v55 = vld [vmem:[%s1 + $0xe0] sm:$0xff]
  %v56 = vld [vmem:[%s1 + $0xe8] sm:$0xff]
  %v57 = vld [vmem:[%s1 + $0xf0] sm:$0xff]
  %v58 = vld [vmem:[%s1 + $0xf8] sm:$0xff]
  %v59 = vld [vmem:[%s2] sm:$0x3]
  %v61 = vperm.slane %v59, 0
  %v62 = vperm.slane %v59, 1
  %65 = vmatpush.msra.mxu0 %v57
  %66 = vmatpush.msra.mxu0 %v55
  %67 = vmatpush.msra.mxu0 %v53
  %68 = vmatpush.msra.mxu0 %v51
  %69 = vmatpush.msra.mxu0 %v49
  %70 = vmatpush.msra.mxu0 %v47
  %71 = vmatpush.msra.mxu0 %v45
  %72 = vmatpush.msra.mxu0 %v43
  %73 = vmatpush.msra.mxu0 %v41
  %74 = vmatpush.msra.mxu0 %v39
  %75 = vmatpush.msra.mxu0 %v37
  %76 = vmatpush.msra.mxu0 %v35
  %77 = vmatpush.msra.mxu0 %v33
  %78 = vmatpush.msra.mxu0 %v31
  %79 = vmatpush.msra.mxu0 %v29
  %80 = vmatpush.msra.mxu0 %v27
  %81 = vmatmul.f32.gmra.mxu0 %v26
  %v82 = vpop.f32.mrf.mxu0
  %v83 = vadd.f32 %v61, %v82
  %84 = vdwg.mxu0
  %85 = vmatpush.msra.mxu0 %v58
  %86 = vmatpush.msra.mxu0 %v56
  %87 = vmatpush.msra.mxu0 %v54
  %88 = vmatpush.msra.mxu0 %v52
  %89 = vmatpush.msra.mxu0 %v50
  %90 = vmatpush.msra.mxu0 %v48
  %91 = vmatpush.msra.mxu0 %v46
  %92 = vmatpush.msra.mxu0 %v44
  %93 = vmatpush.msra.mxu0 %v42
  %94 = vmatpush.msra.mxu0 %v40
  %95 = vmatpush.msra.mxu0 %v38
  %96 = vmatpush.msra.mxu0 %v36
  %97 = vmatpush.msra.mxu0 %v34
  %98 = vmatpush.msra.mxu0 %v32
  %99 = vmatpush.msra.mxu0 %v30
  %100 = vmatpush.msra.mxu0 %v28
  %101 = vmatmul.f32.gmra.mxu0 %v26
  %v102 = vpop.f32.mrf.mxu0
  %v103 = vadd.f32 %v62, %v102
  %104 = vdwg.mxu0
  %v105 = vmax.f32 %v83, 0.0
  %v106 = vmax.f32 %v103, 0.0
  %v107 = vld [vmem:[%s3] sm:$0xff]
  %v108 = vld [vmem:[%s3 + $0x8] sm:$0xff]
  %v109 = vld [vmem:[%s3 + $0x10] sm:$0xff]
  %v110 = vld [vmem:[%s3 + $0x18] sm:$0xff]
  %v111 = vld [vmem:[%s3 + $0x20] sm:$0xff]
  %v112 = vld [vmem:[%s3 + $0x28] sm:$0xff]
  %v113 = vld [vmem:[%s3 + $0x30] sm:$0xff]
  %v114 = vld [vmem:[%s3 + $0x38] sm:$0xff]
  %v115 = vld [vmem:[%s3 + $0x40] sm:$0xff]
  %v116 = vld [vmem:[%s3 + $0x48] sm:$0xff]
  %v117 = vld [vmem:[%s3 + $0x50] sm:$0xff]
  %v118 = vld [vmem:[%s3 + $0x58] sm:$0xff]
  %v119 = vld [vmem:[%s3 + $0x60] sm:$0xff]
  %v120 = vld [vmem:[%s3 + $0x68] sm:$0xff]
  %v121 = vld [vmem:[%s3 + $0x70] sm:$0xff]
  %v122 = vld [vmem:[%s3 + $0x78] sm:$0xff]
  %v123 = vld [vmem:[%s3 + $0x80] sm:$0xff]
  %v124 = vld [vmem:[%s3 + $0x88] sm:$0xff]
  %v125 = vld [vmem:[%s3 + $0x90] sm:$0xff]
  %v126 = vld [vmem:[%s3 + $0x98] sm:$0xff]
  %v127 = vld [vmem:[%s3 + $0xa0] sm:$0xff]
  %v128 = vld [vmem:[%s3 + $0xa8] sm:$0xff]
  %v129 = vld [vmem:[%s3 + $0xb0] sm:$0xff]
  %v130 = vld [vmem:[%s3 + $0xb8] sm:$0xff]
  %v131 = vld [vmem:[%s3 + $0xc0] sm:$0xff]
  %v132 = vld [vmem:[%s3 + $0xc8] sm:$0xff]
  %v133 = vld [vmem:[%s3 + $0xd0] sm:$0xff]
  %v134 = vld [vmem:[%s3 + $0xd8] sm:$0xff]
  %v135 = vld [vmem:[%s3 + $0xe0] sm:$0xff]
  %v136 = vld [vmem:[%s3 + $0xe8] sm:$0xff]
  %v137 = vld [vmem:[%s3 + $0xf0] sm:$0xff]
  %v138 = vld [vmem:[%s3 + $0xf8] sm:$0xff]
  %v139 = vld [vmem:[%s3 + $0x100] sm:$0xff]
  %v140 = vld [vmem:[%s3 + $0x108] sm:$0xff]
  %v141 = vld [vmem:[%s3 + $0x110] sm:$0xff]
  %v142 = vld [vmem:[%s3 + $0x118] sm:$0xff]
  %v143 = vld [vmem:[%s3 + $0x120] sm:$0xff]
  %v144 = vld [vmem:[%s3 + $0x128] sm:$0xff]
  %v145 = vld [vmem:[%s3 + $0x130] sm:$0xff]
  %v146 = vld [vmem:[%s3 + $0x138] sm:$0xff]
  %v147 = vld [vmem:[%s3 + $0x140] sm:$0xff]
  %v148 = vld [vmem:[%s3 + $0x148] sm:$0xff]
  %v149 = vld [vmem:[%s3 + $0x150] sm:$0xff]
  %v150 = vld [vmem:[%s3 + $0x158] sm:$0xff]
  %v151 = vld [vmem:[%s3 + $0x160] sm:$0xff]
  %v152 = vld [vmem:[%s3 + $0x168] sm:$0xff]
  %v153 = vld [vmem:[%s3 + $0x170] sm:$0xff]
  %v154 = vld [vmem:[%s3 + $0x178] sm:$0xff]
  %v155 = vld [vmem:[%s3 + $0x180] sm:$0xff]
  %v156 = vld [vmem:[%s3 + $0x188] sm:$0xff]
  %v157 = vld [vmem:[%s3 + $0x190] sm:$0xff]
  %v158 = vld [vmem:[%s3 + $0x198] sm:$0xff]
  %v159 = vld [vmem:[%s3 + $0x1a0] sm:$0xff]
  %v160 = vld [vmem:[%s3 + $0x1a8] sm:$0xff]
  %v161 = vld [vmem:[%s3 + $0x1b0] sm:$0xff]
  %v162 = vld [vmem:[%s3 + $0x1b8] sm:$0xff]
  %v163 = vld [vmem:[%s3 + $0x1c0] sm:$0xff]
  %v164 = vld [vmem:[%s3 + $0x1c8] sm:$0xff]
  %v165 = vld [vmem:[%s3 + $0x1d0] sm:$0xff]
  %v166 = vld [vmem:[%s3 + $0x1d8] sm:$0xff]
  %v167 = vld [vmem:[%s3 + $0x1e0] sm:$0xff]
  %v168 = vld [vmem:[%s3 + $0x1e8] sm:$0xff]
  %v169 = vld [vmem:[%s3 + $0x1f0] sm:$0xff]
  %v170 = vld [vmem:[%s3 + $0x1f8] sm:$0xff]
  %v171 = vld [vmem:[%s4] sm:$0x3]
  %v173 = vperm.slane %v171, 0
  %v174 = vperm.slane %v171, 1
  %177 = vmatpush.msra.mxu0 %v137
  %178 = vmatpush.msra.mxu0 %v135
  %179 = vmatpush.msra.mxu0 %v133
  %180 = vmatpush.msra.mxu0 %v131
  %181 = vmatpush.msra.mxu0 %v129
  %182 = vmatpush.msra.mxu0 %v127
  %183 = vmatpush.msra.mxu0 %v125
  %184 = vmatpush.msra.mxu0 %v123
  %185 = vmatpush.msra.mxu0 %v121
  %186 = vmatpush.msra.mxu0 %v119
  %187 = vmatpush.msra.mxu0 %v117
  %188 = vmatpush.msra.mxu0 %v115
  %189 = vmatpush.msra.mxu0 %v113
  %190 = vmatpush.msra.mxu0 %v111
  %191 = vmatpush.msra.mxu0 %v109
  %192 = vmatpush.msra.mxu0 %v107
  %193 = vmatmul.f32.gmra.mxu0 %v105
  %v194 = vpop.f32.mrf.mxu0
  %v195 = vadd.f32 %v173, %v194
  %196 = vdwg.mxu0
  %197 = vmatpush.msra.mxu0 %v169
  %198 = vmatpush.msra.mxu0 %v167
  %199 = vmatpush.msra.mxu0 %v165
  %200 = vmatpush.msra.mxu0 %v163
  %201 = vmatpush.msra.mxu0 %v161
  %202 = vmatpush.msra.mxu0 %v159
  %203 = vmatpush.msra.mxu0 %v157
  %204 = vmatpush.msra.mxu0 %v155
  %205 = vmatpush.msra.mxu0 %v153
  %206 = vmatpush.msra.mxu0 %v151
  %207 = vmatpush.msra.mxu0 %v149
  %208 = vmatpush.msra.mxu0 %v147
  %209 = vmatpush.msra.mxu0 %v145
  %210 = vmatpush.msra.mxu0 %v143
  %211 = vmatpush.msra.mxu0 %v141
  %212 = vmatpush.msra.mxu0 %v139
  %213 = vmatmul.f32.gmra.mxu0 %v106
  %v214 = vpop.f32.mrf.mxu0
  %v215 = vadd.f32 %v195, %v214
  %216 = vdwg.mxu0
  %217 = vmatpush.msra.mxu0 %v138
  %218 = vmatpush.msra.mxu0 %v136
  %219 = vmatpush.msra.mxu0 %v134
  %220 = vmatpush.msra.mxu0 %v132
  %221 = vmatpush.msra.mxu0 %v130
  %222 = vmatpush.msra.mxu0 %v128
  %223 = vmatpush.msra.mxu0 %v126
  %224 = vmatpush.msra.mxu0 %v124
  %225 = vmatpush.msra.mxu0 %v122
  %226 = vmatpush.msra.mxu0 %v120
  %227 = vmatpush.msra.mxu0 %v118
  %228 = vmatpush.msra.mxu0 %v116
  %229 = vmatpush.msra.mxu0 %v114
  %230 = vmatpush.msra.mxu0 %v112
  %231 = vmatpush.msra.mxu0 %v110
  %232 = vmatpush.msra.mxu0 %v108
  %233 = vmatmul.f32.gmra.mxu0 %v105
  %v234 = vpop.f32.mrf.mxu0
  %v235 = vadd.f32 %v174, %v234
  %236 = vdwg.mxu0
  %237 = vmatpush.msra.mxu0 %v170
  %238 = vmatpush.msra.mxu0 %v168
  %239 = vmatpush.msra.mxu0 %v166
  %240 = vmatpush.msra.mxu0 %v164
  %241 = vmatpush.msra.mxu0 %v162
  %242 = vmatpush.msra.mxu0 %v160
  %243 = vmatpush.msra.mxu0 %v158
  %244 = vmatpush.msra.mxu0 %v156
  %245 = vmatpush.msra.mxu0 %v154
  %246 = vmatpush.msra.mxu0 %v152
  %247 = vmatpush.msra.mxu0 %v150
  %248 = vmatpush.msra.mxu0 %v148
  %249 = vmatpush.msra.mxu0 %v146
  %250 = vmatpush.msra.mxu0 %v144
  %251 = vmatpush.msra.mxu0 %v142
  %252 = vmatpush.msra.mxu0 %v140
  %253 = vmatmul.f32.gmra.mxu0 %v106
  %v254 = vpop.f32.mrf.mxu0
  %v255 = vadd.f32 %v235, %v254
  %256 = vdwg.mxu0
  %v257 = vmax.f32 %v215, 0.0
  %v258 = vmax.f32 %v255, 0.0
  %v259 = vld [vmem:[%s5] sm:$0xff]
  %v260 = vld [vmem:[%s5 + $0x8] sm:$0xff]
  %v261 = vld [vmem:[%s5 + $0x10] sm:$0xff]
  %v262 = vld [vmem:[%s5 + $0x18] sm:$0xff]
  %v263 = vld [vmem:[%s5 + $0x20] sm:$0xff]
  %v264 = vld [vmem:[%s5 + $0x28] sm:$0xff]
  %v265 = vld [vmem:[%s5 + $0x30] sm:$0xff]
  %v266 = vld [vmem:[%s5 + $0x38] sm:$0xff]
  %v267 = vld [vmem:[%s5 + $0x40] sm:$0xff]
  %v268 = vld [vmem:[%s5 + $0x48] sm:$0xff]
  %v269 = vld [vmem:[%s5 + $0x50] sm:$0xff]
  %v270 = vld [vmem:[%s5 + $0x58] sm:$0xff]
  %v271 = vld [vmem:[%s5 + $0x60] sm:$0xff]
  %v272 = vld [vmem:[%s5 + $0x68] sm:$0xff]
  %v273 = vld [vmem:[%s5 + $0x70] sm:$0xff]
  %v274 = vld [vmem:[%s5 + $0x78] sm:$0xff]
  %v275 = vld [vmem:[%s5 + $0x80] sm:$0xff]
  %v276 = vld [vmem:[%s5 + $0x88] sm:$0xff]
  %v277 = vld [vmem:[%s5 + $0x90] sm:$0xff]
  %v278 = vld [vmem:[%s5 + $0x98] sm:$0xff]
  %v279 = vld [vmem:[%s5 + $0xa0] sm:$0xff]
  %v280 = vld [vmem:[%s5 + $0xa8] sm:$0xff]
  %v281 = vld [vmem:[%s5 + $0xb0] sm:$0xff]
  %v282 = vld [vmem:[%s5 + $0xb8] sm:$0xff]
  %v283 = vld [vmem:[%s5 + $0xc0] sm:$0xff]
  %v284 = vld [vmem:[%s5 + $0xc8] sm:$0xff]
  %v285 = vld [vmem:[%s5 + $0xd0] sm:$0xff]
  %v286 = vld [vmem:[%s5 + $0xd8] sm:$0xff]
  %v287 = vld [vmem:[%s5 + $0xe0] sm:$0xff]
  %v288 = vld [vmem:[%s5 + $0xe8] sm:$0xff]
  %v289 = vld [vmem:[%s5 + $0xf0] sm:$0xff]
  %v290 = vld [vmem:[%s5 + $0xf8] sm:$0xff]
  %v291 = vld [vmem:[%s6] sm:$0x1]
  %v293 = vperm.slane %v291, 0
  %295 = vmatpush.msra.mxu0 %v274
  %296 = vmatpush.msra.mxu0 %v273
  %297 = vmatpush.msra.mxu0 %v272
  %298 = vmatpush.msra.mxu0 %v271
  %299 = vmatpush.msra.mxu0 %v270
  %300 = vmatpush.msra.mxu0 %v269
  %301 = vmatpush.msra.mxu0 %v268
  %302 = vmatpush.msra.mxu0 %v267
  %303 = vmatpush.msra.mxu0 %v266
  %304 = vmatpush.msra.mxu0 %v265
  %305 = vmatpush.msra.mxu0 %v264
  %306 = vmatpush.msra.mxu0 %v263
  %307 = vmatpush.msra.mxu0 %v262
  %308 = vmatpush.msra.mxu0 %v261
  %309 = vmatpush.msra.mxu0 %v260
  %310 = vmatpush.msra.mxu0 %v259
  %311 = vmatmul.f32.gmra.mxu0 %v257
  %v312 = vpop.f32.mrf.mxu0
  %v313 = vadd.f32 %v293, %v312
  %314 = vdwg.mxu0
  %315 = vmatpush.msra.mxu0 %v290
  %316 = vmatpush.msra.mxu0 %v289
  %317 = vmatpush.msra.mxu0 %v288
  %318 = vmatpush.msra.mxu0 %v287
  %319 = vmatpush.msra.mxu0 %v286
  %320 = vmatpush.msra.mxu0 %v285
  %321 = vmatpush.msra.mxu0 %v284
  %322 = vmatpush.msra.mxu0 %v283
  %323 = vmatpush.msra.mxu0 %v282
  %324 = vmatpush.msra.mxu0 %v281
  %325 = vmatpush.msra.mxu0 %v280
  %326 = vmatpush.msra.mxu0 %v279
  %327 = vmatpush.msra.mxu0 %v278
  %328 = vmatpush.msra.mxu0 %v277
  %329 = vmatpush.msra.mxu0 %v276
  %330 = vmatpush.msra.mxu0 %v275
  %331 = vmatmul.f32.gmra.mxu0 %v258
  %v332 = vpop.f32.mrf.mxu0
  %v333 = vadd.f32 %v313, %v332
  %334 = vdwg.mxu0
  %335 = vst [vmem:[%s7] sm:$0xff] %v333
  // Predicated region
  $region30: #{declinear_forward.1} parent=0 // pred_check
    _
  $region31: #{declinear_forward.1} parent=0 // pred_check_branch
    %337 = sbr.rel (0) target = $region33
  $region32: #{declinear_forward.1} parent=0 // pred_region
    _
  $region33: #{declinear_forward.1} parent=0 // pred_fallthru
    _
  // Predicated region
  $region34: #{declinear_forward.1} parent=0 // pred_check
    _
  $region35: #{declinear_forward.1} parent=0 // pred_check_branch
    %339 = sbr.rel (0) target = $region37
  $region36: #{declinear_forward.1} parent=0 // pred_region
    _
  $region37: #{declinear_forward.1} parent=0 // pred_fallthru
    _

</llo_original>
